<compile_context>
chip_gen: v6e
topology: v6e:2x2x1
jax: 0.10.0
libtpu: 0.0.40
codegen_flags: <defaults>
</compile_context>

<pallas_src>
import functools

import jax
import jax.numpy as jnp
from jax.experimental import pallas as pl
from jax.experimental.pallas import tpu as pltpu


def _ceil_div(a, b):
    return -(-a // b)


def _round_up(a, b):
    return _ceil_div(a, b) * b


def _vmem_capacity_bytes():
    """Physical VMEM capacity; conservative fallback if the query fails."""
    try:
        cap = int(pltpu.get_tpu_info().vmem_capacity_bytes)
        if cap > 0:
            return cap
    except Exception:
        pass
    return 64 << 20  # v7x per-TensorCore size: safe lower bound everywhere.


def _rmsnorm_kernel(x_ref, w_ref, o_ref, *, eps, inv_d, narrow_scale):
    # x_ref: (tile_rows, D) VMEM tile; w_ref: (1, D) VMEM (constant index_map
    # across the grid, so Pallas does not re-DMA it each step).
    x = x_ref[...]
    xf = x.astype(jnp.float32)
    # sum * (1/D) instead of mean: folds the divide into a compile-time const.
    ms = jnp.sum(xf * xf, axis=-1, keepdims=True) * inv_d
    inv = jax.lax.rsqrt(ms + eps)  # EUP rsqrt, f32
    if narrow_scale:
        # Sub-32-bit inputs: do the two scale multiplies packed in the native
        # dtype (halves VALU work per element; matters on v7x where 3.2 TB/s
        # HBM no longer hides f32 VALU passes). Accuracy: sum/rsqrt stay f32.
        o_ref[...] = (x * inv.astype(x.dtype)) * w_ref[...].astype(x.dtype)
    else:
        # f32 path: everything in f32, single cast at the end (matches the
        # PyTorch module exactly for f32 inputs).
        y = xf * inv * w_ref[...].astype(jnp.float32)
        o_ref[...] = y.astype(o_ref.dtype)


def _choose_tile_rows(rows, d, in_itemsize, vmem_cap):
    """Pick a large, sublane-aligned row tile for this mem-bound op.

    Sized from the actual VMEM capacity and an honest per-row byte cost:
    double-buffered input + output tiles plus the in-kernel f32 intermediates.
    """
    # bf16 packs 2 rows per sublane -> multiples of 16; f32 -> multiples of 8.
    sub = 16 if in_itemsize < 4 else 8
    rows_padded = _round_up(max(rows, 1), sub)

    # Per-row VMEM cost (bytes):
    #   2 buffers x (input tile + output tile)           = 4 * itemsize * D
    #   in-kernel f32 intermediates (upcast x, products) = 8 * D (sub-f32)
    #                                                      4 * D (f32 input)
    f32_extra = 8 if in_itemsize < 4 else 4
    per_row_bytes = d * (4 * in_itemsize + f32_extra)

    # Use ~45% of physical VMEM for the pipeline working set (headroom for
    # Mosaic internal scratch / semaphores), and cap single blocks at 16 MiB.
    budget = int(0.45 * vmem_cap)
    t_budget = max(sub, (budget // max(1, per_row_bytes)) // sub * sub)
    t_cap = max(sub, ((16 << 20) // max(1, d * in_itemsize)) // sub * sub)
    t = min(t_budget, t_cap, rows_padded)

    # Keep >= 4 grid steps when rows allow: on v7x the row grid is split across
    # two TensorCores, so >= 2 steps per core restores per-core DMA/compute
    # overlap and balances a ragged last block.
    max_steps = rows_padded // sub
    want = min(4, max_steps)
    steps = _ceil_div(rows_padded, t)
    if steps < want:
        t = _round_up(_ceil_div(rows_padded, want), sub)
        steps = _ceil_div(rows_padded, t)

    # Prefer an even step count (balanced split across 2 TCs) when cheap.
    if steps % 2 == 1 and steps + 1 <= max_steps:
        t_even = _round_up(_ceil_div(rows_padded, steps + 1), sub)
        if t_even >= sub and _ceil_div(rows_padded, t_even) % 2 == 0:
            t = t_even

    return t


def rmsnorm(x, weight, eps=1e-5, tile_rows=None):
    """RMSNorm over the last axis of x, scaled by `weight` (shape (emb_dim,))."""
    orig_shape = x.shape
    D = orig_shape[-1]
    rows = 1
    for s in orig_shape[:-1]:
        rows *= s

    x2 = x.reshape(rows, D)
    w2 = weight.reshape(1, D)

    itemsize = jnp.dtype(x.dtype).itemsize
    vmem_cap = _vmem_capacity_bytes()
    if tile_rows is None:
        tile_rows = _choose_tile_rows(rows, D, itemsize, vmem_cap)

    # Ragged last block handled by Pallas (reads padded, writes masked);
    # no wrapper-side pad/slice, so no extra HBM pass.
    grid = (pl.cdiv(rows, tile_rows),)

    # VMEM budget: 2 buffers x (input tile + output tile) + f32 intermediates
    # + weight + modest headroom for Mosaic internal scratch; capped below the
    # physical capacity.
    tile_bytes = tile_rows * D * itemsize
    f32_tmp_bytes = tile_rows * D * (8 if itemsize < 4 else 4)
    w_bytes = D * jnp.dtype(weight.dtype).itemsize
    vmem_limit = 2 * 2 * tile_bytes + f32_tmp_bytes + w_bytes + (4 << 20)
    vmem_limit = int(min(max(vmem_limit, 16 << 20), int(0.92 * vmem_cap)))

    kernel = functools.partial(
        _rmsnorm_kernel,
        eps=float(eps),
        inv_d=1.0 / float(D),
        narrow_scale=(itemsize < 4),
    )

    # Note: "parallel" shards the row grid across v7x's two TensorCores; if a
    # trace shows single-TC execution, switch to pltpu.CORE_PARALLEL.
    out = pl.pallas_call(
        kernel,
        out_shape=jax.ShapeDtypeStruct((rows, D), x.dtype),
        grid_spec=pltpu.PrefetchScalarGridSpec(
            num_scalar_prefetch=0,
            grid=grid,
            in_specs=[
                pl.BlockSpec((tile_rows, D), lambda i: (i, 0)),
                pl.BlockSpec((1, D), lambda i: (0, 0)),
            ],
            out_specs=pl.BlockSpec((tile_rows, D), lambda i: (i, 0)),
        ),
        compiler_params=pltpu.CompilerParams(
            dimension_semantics=("parallel",),
            vmem_limit_bytes=vmem_limit,
        ),
    )(x2, w2)

    return out.reshape(orig_shape)


if __name__ == "__main__":
    key = jax.random.PRNGKey(0)
    kx, kw = jax.random.split(key)

    # D is a multiple of 128 so output stores are lane-dense (unmasked vst).
    batch, seq, emb_dim = 2, 8, 256
    x = jax.random.normal(kx, (batch, seq, emb_dim), dtype=jnp.float32)
    # Module initializes weight to ones; perturb it deterministically so the
    # check actually exercises the weight multiply.
    weight = jnp.ones((emb_dim,), dtype=jnp.float32) + 0.1 * jax.random.normal(
        kw, (emb_dim,), dtype=jnp.float32
    )

    eps = 1e-5

    # f32: exact-path check against the plain-JAX reference of the PyTorch fwd.
    out = jax.block_until_ready(rmsnorm(x, weight, eps=eps))
    means = jnp.mean(x.astype(jnp.float32) ** 2, axis=-1, keepdims=True)
    ref = (x * jax.lax.rsqrt(means + eps) * weight).astype(x.dtype)
    assert out.shape == x.shape and out.dtype == x.dtype
    assert jnp.allclose(out, ref, atol=1e-5, rtol=1e-5)

    # bf16: exercises the packed-scale path (loose tolerance for bf16 rounding).
    xb = x.astype(jnp.bfloat16)
    out_b = jax.block_until_ready(rmsnorm(xb, weight, eps=eps))
    xbf = xb.astype(jnp.float32)
    means_b = jnp.mean(xbf ** 2, axis=-1, keepdims=True)
    ref_b = (xbf * jax.lax.rsqrt(means_b + eps) * weight).astype(jnp.bfloat16)
    assert out_b.shape == xb.shape and out_b.dtype == xb.dtype
    assert jnp.allclose(
        out_b.astype(jnp.float32), ref_b.astype(jnp.float32), atol=5e-2, rtol=5e-2
    )

    print("KERNEL_OK")
</pallas_src>

<mosaic_0001>
module attributes {stable_mosaic.version = 11 : i64} {
  func.func @_rmsnorm_kernel(%arg0: i32, %arg1: memref<8x256xf32, #tpu.memory_space<vmem>>, %arg2: memref<1x256xf32, #tpu.memory_space<vmem>>, %arg3: memref<8x256xf32, #tpu.memory_space<vmem>>) attributes {dimension_semantics = [#tpu.dimension_semantics<parallel>], iteration_bounds = array<i64: 2>, scalar_prefetch = 0 : i64, scratch_operands = 0 : i64, tpu.core_type = #tpu.core_type<tc>, window_params = [{transform_indices = @transform_0, window_bounds = array<i64: 8, 256>}, {pipeline_mode = #tpu.pipeline_mode<synchronous>, transform_indices = @transform_1, window_bounds = array<i64: 1, 256>}, {transform_indices = @transform_2, window_bounds = array<i64: 8, 256>}]} {
    %c0 = arith.constant 0 : index
    %c0_0 = arith.constant 0 : index
    %0 = vector.load %arg1[%c0, %c0_0] : memref<8x256xf32, #tpu.memory_space<vmem>>, vector<8x256xf32>
    %1 = arith.mulf %0, %0 : vector<8x256xf32>
    %cst = arith.constant dense<0.000000e+00> : vector<8xf32>
    %2 = vector.multi_reduction <add>, %1, %cst [1] : vector<8x256xf32> to vector<8xf32>
    %3 = vector.shape_cast %2 : vector<8xf32> to vector<8x1xf32>
    %cst_1 = arith.constant 3.906250e-03 : f32
    %4 = vector.broadcast %cst_1 : f32 to vector<8x1xf32>
    %5 = arith.mulf %3, %4 : vector<8x1xf32>
    %cst_2 = arith.constant 9.99999974E-6 : f32
    %6 = vector.broadcast %cst_2 : f32 to vector<8x1xf32>
    %7 = arith.addf %5, %6 : vector<8x1xf32>
    %8 = math.rsqrt %7 : vector<8x1xf32>
    %9 = vector.broadcast %8 : vector<8x1xf32> to vector<8x256xf32>
    %10 = arith.mulf %0, %9 : vector<8x256xf32>
    %c0_3 = arith.constant 0 : index
    %c0_4 = arith.constant 0 : index
    %11 = vector.load %arg2[%c0_3, %c0_4] : memref<1x256xf32, #tpu.memory_space<vmem>>, vector<1x256xf32>
    %12 = vector.broadcast %11 : vector<1x256xf32> to vector<8x256xf32>
    %13 = arith.mulf %10, %12 : vector<8x256xf32>
    %c0_5 = arith.constant 0 : index
    %c0_6 = arith.constant 0 : index
    %14 = vector.load %arg3[%c0_5, %c0_6] : memref<8x256xf32, #tpu.memory_space<vmem>>, vector<8x256xf32>
    tpu.vector_store %arg3[%c0_5, %c0_6], %13 {strides = array<i32>} : memref<8x256xf32, #tpu.memory_space<vmem>>, vector<8x256xf32>,
    return
  }
  func.func @transform_0(%arg0: i32) -> (i32, i32) {
    %c0_i32 = arith.constant 0 : i32
    %c0_i32_0 = arith.constant 0 : i32
    return %arg0, %c0_i32 : i32, i32
  }
  func.func @transform_1(%arg0: i32) -> (i32, i32) {
    %c0_i32 = arith.constant 0 : i32
    %c0_i32_0 = arith.constant 0 : i32
    %c0_i32_1 = arith.constant 0 : i32
    return %c0_i32, %c0_i32_0 : i32, i32
  }
  func.func @transform_2(%arg0: i32) -> (i32, i32) {
    %c0_i32 = arith.constant 0 : i32
    %c0_i32_0 = arith.constant 0 : i32
    return %arg0, %c0_i32 : i32, i32
  }
}

</mosaic_0001>

<llo_original>
// kernel: tpu_custom_call.1
$region0: #{tpu_custom_call.1}
  #allocation0 [shape = 'u32[]', space=smem, size = 0x4, offset = 0x4, fixed_abs, tag = 'smem constant byte address 0x4 - core index']
  #allocation1 [shape = 'u32[144,128]{1,0:T(1,128)}', space=vmem, size = 0x12000, scoped, tag = 'internal scratch']
  %s0 = inlined_call_operand.hbm [shape: f32[16,256], index: 0, kind: input, shape index: {}]
  %s1 = inlined_call_operand.hbm [shape: f32[1,256], index: 1, kind: input, shape index: {}]
  %s2 = inlined_call_operand.hbm [shape: f32[16,256], index: 2, kind: output, shape index: {}]
  %s3 = sld [smem:[#allocation0]]
  $region49: #{tpu_custom_call.1} parent=0
    _
  %s5 = ssub.s32 1, %s3
  %s6 = scalar_select 0, %s5, %s3
  $region1: #{tpu_custom_call.1} parent=0
    #allocation2 [shape = 'u8[16384]{0}', space=vmem, size = 0x4000, scoped, tag = 'input window, operand 0']
    #allocation3 [shape = 's32[2]{0}', space=sflag, size = 0x8, scoped, tag = 'scoped memory for tpu_custom_call.1']
    #allocation4 [shape = 's32[2]{0}', space=sflag, size = 0x8, scoped, tag = 'scoped memory for tpu_custom_call.1']
    #allocation5 [shape = 'u8[1024]{0}', space=vmem, size = 0x400, scoped, tag = 'input window, operand 1, single buffered']
    #allocation6 [shape = 's32[1]{0}', space=sflag, size = 0x4, scoped, tag = 'scoped memory for tpu_custom_call.1']
    #allocation7 [shape = 'u8[16384]{0}', space=vmem, size = 0x4000, scoped, tag = 'output window, operand 0']
    %7 = vsyncpa [#allocation3], 0
    %s8 = scalar_lea.sflag [#allocation3], 1
    %9 = vsyncpa %s8, 0
    %10 = vsyncpa [#allocation6], 0
    %11 = vsyncpa [#allocation4], 0
    %s12 = scalar_lea.sflag [#allocation4], 1
    %13 = vsyncpa %s12, 0
    loop: start=0, step=1, limit=4
    $region2: #{tpu_custom_call.1} parent=1 // loop_pre_header
      _
    $region3: #{tpu_custom_call.1} parent=1 // loop_header
      %s15 = sphi 0, %s19
      %p16 = scmp.ge.s32.totalorder %s15, 4
      %s25 = sphi 0, %s27
      %s28 = sphi 0, %s25
      %s29 = sphi 0, %s28
      %s45 = sphi 0, %s29
      %s49 = sphi 0, %s49
      %s51 = sphi 0, %s49
      %s52 = sphi 0, %s51
      %s66 = sphi 0, %s52
      %s72 = sphi 0, %s74
      %s75 = sphi 0, %s72
      %s76 = sphi 0, %s75
      %s92 = sphi 0, %s76
    $region4: #{tpu_custom_call.1} parent=1 // loop_header_branch
      %18 = sbr.rel (%p16) target = $region8
    $region5: #{tpu_custom_call.1} parent=1 // loop_body
      %s20 = ssub.s32 %s15, 1
      %s21 = ssub.s32 %s15, 2
      %s22 = sadd.s32 %s15, 1
      %s23 = ssub.s32 %s15, %s22
      %p24 = scmp.eq.s32.totalorder %s23, 0
      %s26 = sadd.s32 %s25, 1
      %s27 = scalar_select %p24, %s25, %s26
      %p30 = pneg %p24
      %p31 = scmp.eq.s32.totalorder %s15, 1
      %p32 = por %p30, %p31
      %p33 = scmp.ne.s32.totalorder %s25, %s28
      %p34 = scmp.eq.s32.totalorder %s15, 0
      %p35 = por %p33, %p34
      %p36 = scmp.ne.s32.totalorder %s25, %s28
      %p37 = scmp.eq.s32.totalorder %s20, 1
      %p38 = por %p36, %p37
      %p39 = scmp.ne.s32.totalorder %s28, %s29
      %p40 = scmp.eq.s32.totalorder %s20, 0
      %p41 = por %p39, %p40
      %p42 = scmp.ne.s32.totalorder %s28, %s29
      %p43 = scmp.eq.s32.totalorder %s21, 1
      %p44 = por %p42, %p43
      %p46 = scmp.ne.s32.totalorder %s29, %s45
      %p47 = scmp.eq.s32.totalorder %s21, 0
      %p48 = por %p46, %p47
      %s50 = sadd.s32 %s49, 1
      %p53 = scmp.eq.s32.totalorder %s15, 1
      %p54 = scmp.ne.s32.totalorder %s49, %s51
      %p55 = scmp.eq.s32.totalorder %s15, 0
      %p56 = por %p54, %p55
      %p57 = scmp.ne.s32.totalorder %s49, %s51
      %p58 = scmp.eq.s32.totalorder %s20, 1
      %p59 = por %p57, %p58
      %p60 = scmp.ne.s32.totalorder %s51, %s52
      %p61 = scmp.eq.s32.totalorder %s20, 0
      %p62 = por %p60, %p61
      %p63 = scmp.ne.s32.totalorder %s51, %s52
      %p64 = scmp.eq.s32.totalorder %s21, 1
      %p65 = por %p63, %p64
      %p67 = scmp.ne.s32.totalorder %s52, %s66
      %p68 = scmp.eq.s32.totalorder %s21, 0
      %p69 = por %p67, %p68
      %s70 = ssub.s32 %s15, %s22
      %p71 = scmp.eq.s32.totalorder %s70, 0
      %s73 = sadd.s32 %s72, 1
      %s74 = scalar_select %p71, %s72, %s73
      %p77 = pneg %p71
      %p78 = scmp.eq.s32.totalorder %s15, 1
      %p79 = por %p77, %p78
      %p80 = scmp.ne.s32.totalorder %s72, %s75
      %p81 = scmp.eq.s32.totalorder %s15, 0
      %p82 = por %p80, %p81
      %p83 = scmp.ne.s32.totalorder %s72, %s75
      %p84 = scmp.eq.s32.totalorder %s20, 1
      %p85 = por %p83, %p84
      %p86 = scmp.ne.s32.totalorder %s75, %s76
      %p87 = scmp.eq.s32.totalorder %s20, 0
      %p88 = por %p86, %p87
      %p89 = scmp.ne.s32.totalorder %s75, %s76
      %p90 = scmp.eq.s32.totalorder %s21, 1
      %p91 = por %p89, %p90
      %p93 = scmp.ne.s32.totalorder %s76, %s92
      %p94 = scmp.eq.s32.totalorder %s21, 0
      %p95 = por %p93, %p94
      %p96 = scmp.le.s32.totalorder 1, %s15
      %p97 = scmp.lt.s32.totalorder %s15, 3
      %p98 = pnand %p96, %p97
      %p99 = pneg %p98
      // Predicated region
      $region9: #{tpu_custom_call.1} parent=5 // pred_check
        _
      $region10: #{tpu_custom_call.1} parent=5 // pred_check_branch
        %101 = sbr.rel (%p98) target = $region12
      $region11: #{tpu_custom_call.1} parent=5 // pred_region
        %s102 = ssub.s32 %s15, 1
        // Predicated region
        $region13: #{tpu_custom_call.1} parent=11 // pred_check
          %p103 = pneg %p62
        $region14: #{tpu_custom_call.1} parent=11 // pred_check_branch
          %105 = sbr.rel (%p103) target = $region16
        $region15: #{tpu_custom_call.1} parent=11 // pred_region
          %s107 = ssub.s32 32, 32
          %108 = vsyncadd [#allocation6], %s107
          %s110 = sshll.u32 [#allocation5], 4
          %s111 = int_to_ptr.vmem [resolvable:$true] %s110
          %113 = dma.hbm_to_vmem [thread:$0]  %s1, 32, %s111, [#allocation6]
        $region16: #{tpu_custom_call.1} parent=11 // pred_fallthru
          _
      $region12: #{tpu_custom_call.1} parent=5 // pred_fallthru
        _
      %p114 = scmp.lt.s32.totalorder %s15, 2
      // Predicated region
      $region17: #{tpu_custom_call.1} parent=5 // pred_check
        %p115 = pneg %p114
      $region18: #{tpu_custom_call.1} parent=5 // pred_check_branch
        %117 = sbr.rel (%p115) target = $region20
      $region19: #{tpu_custom_call.1} parent=5 // pred_region
        // Predicated region
        $region21: #{tpu_custom_call.1} parent=19 // pred_check
          %p118 = pneg %p35
        $region22: #{tpu_custom_call.1} parent=19 // pred_check_branch
          %120 = sbr.rel (%p118) target = $region24
        $region23: #{tpu_custom_call.1} parent=19 // pred_region
          %s121 = sand.u32 %s25, 1
          %s122 = scalar_lea.sflag [#allocation3], %s121
          %s123 = sand.u32 %s25, 1
          %s124 = smul.addr %s123, 16
          %s125 = scalar_lea.vmem [#allocation2], %s124
          %s127 = ssub.s32 256, 256
          %128 = vsyncadd %s122, %s127
          %s129 = smul.addr %s15, 2
          %s130 = smul.addr %s129, 128
          %s131 = scalar_lea.hbm %s0, %s130
          %s133 = sshll.u32 %s125, 4
          %s134 = int_to_ptr.vmem [resolvable:$true] %s133
          %136 = dma.hbm_to_vmem [thread:$0]  %s131, 256, %s134, %s122
        $region24: #{tpu_custom_call.1} parent=19 // pred_fallthru
          _
      $region20: #{tpu_custom_call.1} parent=5 // pred_fallthru
        _
      %p137 = scmp.le.s32.totalorder 1, %s15
      %p138 = scmp.lt.s32.totalorder %s15, 3
      %p139 = pnand %p137, %p138
      %p140 = pneg %p139
      // Predicated region
      $region25: #{tpu_custom_call.1} parent=5 // pred_check
        _
      $region26: #{tpu_custom_call.1} parent=5 // pred_check_branch
        %142 = sbr.rel (%p139) target = $region28
      $region27: #{tpu_custom_call.1} parent=5 // pred_region
        %s143 = ssub.s32 %s15, 1
        %s144 = sand.u32 %s28, 1
        %s145 = scalar_lea.sflag [#allocation3], %s144
        %s146 = sand.u32 %s28, 1
        %s147 = smul.addr %s146, 16
        %s148 = scalar_lea.vmem [#allocation2], %s147
        // Predicated region
        $region29: #{tpu_custom_call.1} parent=27 // pred_check
          %p149 = pneg %p41
        $region30: #{tpu_custom_call.1} parent=27 // pred_check_branch
          %151 = sbr.rel (%p149) target = $region32
        $region31: #{tpu_custom_call.1} parent=27 // pred_region
          %152 = dma.done %s145, 256
        $region32: #{tpu_custom_call.1} parent=27 // pred_fallthru
          _
        // Predicated region
        $region33: #{tpu_custom_call.1} parent=27 // pred_check
          %p153 = pneg %p62
        $region34: #{tpu_custom_call.1} parent=27 // pred_check_branch
          %155 = sbr.rel (%p153) target = $region36
        $region35: #{tpu_custom_call.1} parent=27 // pred_region
          %156 = dma.done [#allocation6], 32
        $region36: #{tpu_custom_call.1} parent=27 // pred_fallthru
          _
        %s157 = sand.u32 %s28, 1
        %s158 = scalar_lea.sflag [#allocation3], %s157
        %s159 = sand.u32 %s28, 1
        %s160 = smul.addr %s159, 16
        %s161 = scalar_lea.vmem [#allocation2], %s160
        %p162 = pneg %p41
        %p163 = pneg %p38
        %p164 = pneg %p62
        %p165 = pneg %p59
        %p166 = pneg %p88
        %p167 = pneg %p85
        %s168 = sand.u32 %s75, 1
        %s169 = scalar_lea.sflag [#allocation4], %s168
        %s170 = sand.u32 %s75, 1
        %s171 = smul.addr %s170, 16
        %s172 = scalar_lea.vmem [#allocation7], %s171
        %v173 = vld [vmem:[%s148] sm:$0xff]
        %v174 = vld [vmem:[%s148 + $0x8] sm:$0xff]
        %v175 = vmul.f32 %v173, %v173
        %v176 = vmul.f32 %v174, %v174
        %v177 = vadd.f32 %v175, %v176
        %178 = vadd.xlane.f32.xlu0 %v177
        %v179 = vpop.xlane.xlu0 %178
        %v180 = vmul.f32 %v179, 0.00390625
        %v181 = vadd.f32 %v180, 1e-05
        %v182 = vrsqrt.pop %v181
        %v183 = vmul.f32 %v173, %v182
        %v184 = vmul.f32 %v174, %v182
        %v185 = vld [vmem:[#allocation5] sm:$0x3]
        %v187 = vlaneseq
        %v188 = vshrl.u32 %v187, 7
        %v189 = vsub.s32 0, %v188
        %v190 = vrot.slane %v185, %v189
        %v191 = vlaneseq
        %v192 = vshrl.u32 %v191, 7
        %v193 = vsub.s32 1, %v192
        %v194 = vrot.slane %v185, %v193
        %v197 = vmul.f32 %v183, %v190
        %v198 = vmul.f32 %v184, %v194
        %199 = vst [vmem:[%s172] sm:$0xff] %v197
        %200 = vst [vmem:[%s172 + $0x8] sm:$0xff] %v198
        %s201 = sand.u32 %s75, 1
        %s202 = scalar_lea.sflag [#allocation4], %s201
        %s203 = sand.u32 %s75, 1
        %s204 = smul.addr %s203, 16
        %s205 = scalar_lea.vmem [#allocation7], %s204
        // Predicated region
        $region37: #{tpu_custom_call.1} parent=27 // pred_check
          %p206 = pneg %p85
        $region38: #{tpu_custom_call.1} parent=27 // pred_check_branch
          %208 = sbr.rel (%p206) target = $region40
        $region39: #{tpu_custom_call.1} parent=27 // pred_region
          %s210 = ssub.s32 256, 256
          %211 = vsyncadd %s202, %s210
          %s212 = smul.addr %s20, 2
          %s213 = smul.addr %s212, 128
          %s214 = scalar_lea.hbm %s2, %s213
          %s216 = sshll.u32 %s205, 4
          %s217 = int_to_ptr.vmem [resolvable:$true] %s216
          %219 = dma.vmem_to_hbm [thread:$0]  %s217, 256, %s214, %s202
        $region40: #{tpu_custom_call.1} parent=27 // pred_fallthru
          _
      $region28: #{tpu_custom_call.1} parent=5 // pred_fallthru
        _
      %p220 = scmp.le.s32.totalorder 2, %s15
      // Predicated region
      $region41: #{tpu_custom_call.1} parent=5 // pred_check
        %p221 = pneg %p220
      $region42: #{tpu_custom_call.1} parent=5 // pred_check_branch
        %223 = sbr.rel (%p221) target = $region44
      $region43: #{tpu_custom_call.1} parent=5 // pred_region
        %s224 = ssub.s32 %s15, 2
        // Predicated region
        $region45: #{tpu_custom_call.1} parent=43 // pred_check
          %p225 = pneg %p91
        $region46: #{tpu_custom_call.1} parent=43 // pred_check_branch
          %227 = sbr.rel (%p225) target = $region48
        $region47: #{tpu_custom_call.1} parent=43 // pred_region
          %s228 = sand.u32 %s76, 1
          %s229 = scalar_lea.sflag [#allocation4], %s228
          %s230 = sand.u32 %s76, 1
          %s231 = smul.addr %s230, 16
          %s232 = scalar_lea.vmem [#allocation7], %s231
          %233 = dma.done %s229, 256
        $region48: #{tpu_custom_call.1} parent=43 // pred_fallthru
          _
      $region44: #{tpu_custom_call.1} parent=5 // pred_fallthru
        _
    $region6: #{tpu_custom_call.1} parent=1 // loop_footer
      %s19 = sadd.s32 1, %s15
    $region7: #{tpu_custom_call.1} parent=1 // loop_footer_branch
      %14 = sbr.rel target = $region3
    $region8: #{tpu_custom_call.1} parent=1 // loop_exit
      _
    %234 = vsyncpa [#allocation3], 1
    %s235 = scalar_lea.sflag [#allocation3], 1
    %236 = vsyncpa %s235, 1
    %237 = vsyncpa [#allocation6], 1
    %238 = vsyncpa [#allocation4], 1
    %s239 = scalar_lea.sflag [#allocation4], 1
    %240 = vsyncpa %s239, 1

</llo_original>
